<compile_context>
chip_gen: v6e
topology: v6e:2x2x1
jax: 0.10.0
libtpu: 0.0.40
codegen_flags: <defaults>
</compile_context>

<pallas_src>
import jax
import jax.numpy as jnp
from jax.experimental import pallas as pl
from jax.experimental.pallas import tpu as pltpu


# ----------------------------- Pallas kernel -------------------------------
def make_conv_relu_kernel(B, CK, OHW, OC):
    def kernel(p_ref, w_ref, b_ref, out_ref):
        # p_ref  : (B, CK, OHW)   im2col patches, contraction axis second
        # w_ref  : (OC, CK)       weights (already scaled by 1/255)
        # b_ref  : (OC, 1)
        # out_ref: (B, OC, OHW)
        w = w_ref[...]                       # keep weight resident across batch
        b = b_ref[...]
        for bi in range(B):                  # static unroll over batch block
            acc = jnp.dot(w, p_ref[bi],      # (OC, CK) @ (CK, OHW) -> (OC, OHW)
                          preferred_element_type=jnp.float32)
            out_ref[bi] = jnp.maximum(acc + b, 0.0).astype(out_ref.dtype)

    return kernel


def cnn_layer_pallas(x_nchw, weight, bias, kernel_size=3, stride=1):
    """Forward pass of CNNLayer.

    x_nchw : (B, C, H, W) float32
    weight : (OC, C, KH, KW) float32
    bias   : (OC,) float32
    returns: (B, OC*OH*OW) float32   (matches nn.Flatten on NCHW conv output)
    """
    B, C, H, W = x_nchw.shape
    OC, _, KH, KW = weight.shape
    OH = (H - KH) // stride + 1
    OW = (W - KW) // stride + 1
    OHW = OH * OW
    KT = KH * KW
    CK = C * KT

    # ---- glue: im2col with contraction axis ordered (c, kh, kw) ------------
    taps = []
    for kh in range(KH):
        for kw in range(KW):
            sl = x_nchw[:, :, kh:kh + stride * OH:stride,
                              kw:kw + stride * OW:stride]       # (B, C, OH, OW)
            taps.append(sl.reshape(B, C, OHW))
    # (B, C, KT, OHW) -> (B, C*KT, OHW); index c*KT + (kh*KW + kw)
    patches = jnp.stack(taps, axis=2).reshape(B, CK, OHW)

    # weight.reshape(OC, C*KH*KW) has the same (c, kh, kw) ordering;
    # fold the 1/255 input scale into the (tiny, reused) weight matrix.
    w_mat = weight.reshape(OC, CK).astype(jnp.float32) * jnp.float32(1.0 / 255.0)
    b2d = bias.reshape(OC, 1).astype(jnp.float32)

    kernel = make_conv_relu_kernel(B, CK, OHW, OC)

    out = pl.pallas_call(
        kernel,
        out_shape=jax.ShapeDtypeStruct((B, OC, OHW), jnp.float32),
        grid=(1,),  # whole problem fits trivially in VMEM on v5e/v6e/v7x
        in_specs=[
            pl.BlockSpec((B, CK, OHW), lambda i: (0, 0, 0)),
            pl.BlockSpec((OC, CK), lambda i: (0, 0)),
            pl.BlockSpec((OC, 1), lambda i: (0, 0)),
        ],
        out_specs=pl.BlockSpec((B, OC, OHW), lambda i: (0, 0, 0)),
        compiler_params=pltpu.CompilerParams(
            dimension_semantics=("arbitrary",)),
    )(patches, w_mat, b2d)

    # (B, OC, OHW) row-major == conv output (B, OC, OH, OW) flattened: free reshape.
    return out.reshape(B, OC * OHW)


# ------------------------- deterministic init ------------------------------
def orthogonal_init(key, shape, gain):
    """Orthogonal init (like nn.init.orthogonal_) for a 2D matrix `shape`."""
    rows, cols = shape
    n = max(rows, cols)
    a = jax.random.normal(key, (n, n), dtype=jnp.float32)
    q, r = jnp.linalg.qr(a)
    q = q * jnp.sign(jnp.diag(r))  # deterministic sign convention
    return gain * q[:rows, :cols]


def reference_forward(x_nchw, weight, bias):
    """Pure-JAX reference (lax conv) for verification."""
    y = jax.lax.conv_general_dilated(
        x_nchw / 255.0, weight, window_strides=(1, 1), padding="VALID",
        dimension_numbers=("NCHW", "OIHW", "NCHW"))
    y = jax.nn.relu(y + bias.reshape(1, -1, 1, 1))
    return y.reshape(y.shape[0], -1)


# --------------------------------- main -------------------------------------
if __name__ == "__main__":
    # Module config: obs_shape=(C, W, H)=(4, 16, 16), hidden_sizes=[32]
    # -> out_channels = 32 // 2 = 16, kernel_size=3, stride=1, activation=ReLU.
    B, C, H, W = 2, 4, 16, 16
    hidden_sizes = [32]
    OC = hidden_sizes[0] // 2
    K, S = 3, 1

    key = jax.random.PRNGKey(0)
    kx, kw = jax.random.split(key)

    # input in [0, 255] like image observations
    x = jax.random.uniform(kx, (B, C, H, W), dtype=jnp.float32,
                           minval=0.0, maxval=255.0)

    # orthogonal init with gain = calculate_gain('relu') = sqrt(2), bias = 0
    gain = 2.0 ** 0.5
    w_flat = orthogonal_init(kw, (OC, C * K * K), gain)
    weight = w_flat.reshape(OC, C, K, K).astype(jnp.float32)
    bias = jnp.zeros((OC,), dtype=jnp.float32)

    out = cnn_layer_pallas(x, weight, bias, kernel_size=K, stride=S)
    out = jax.block_until_ready(out)

    ref = reference_forward(x, weight, bias)
    assert out.shape == (B, OC * (H - K + S) * (W - K + S)), out.shape
    assert jnp.allclose(out, ref, atol=1e-3, rtol=1e-3), float(
        jnp.max(jnp.abs(out - ref)))

    print("KERNEL_OK")
</pallas_src>

<mosaic_0001>
module attributes {stable_mosaic.version = 11 : i64} {
  func.func @kernel(%arg0: i32, %arg1: memref<2x36x196xf32, #tpu.memory_space<vmem>>, %arg2: memref<16x36xf32, #tpu.memory_space<vmem>>, %arg3: memref<16x1xf32, #tpu.memory_space<vmem>>, %arg4: memref<2x16x196xf32, #tpu.memory_space<vmem>>) attributes {dimension_semantics = [#tpu.dimension_semantics<arbitrary>], iteration_bounds = array<i64: 1>, scalar_prefetch = 0 : i64, scratch_operands = 0 : i64, tpu.core_type = #tpu.core_type<tc>, window_params = [{pipeline_mode = #tpu.pipeline_mode<synchronous>, transform_indices = @transform_0, window_bounds = array<i64: 2, 36, 196>}, {pipeline_mode = #tpu.pipeline_mode<synchronous>, transform_indices = @transform_1, window_bounds = array<i64: 16, 36>}, {pipeline_mode = #tpu.pipeline_mode<synchronous>, transform_indices = @transform_2, window_bounds = array<i64: 16, 1>}, {pipeline_mode = #tpu.pipeline_mode<synchronous>, transform_indices = @transform_3, window_bounds = array<i64: 2, 16, 196>}]} {
    %c0 = arith.constant 0 : index
    %c0_0 = arith.constant 0 : index
    %0 = vector.load %arg2[%c0, %c0_0] : memref<16x36xf32, #tpu.memory_space<vmem>>, vector<16x36xf32>
    %c0_1 = arith.constant 0 : index
    %c0_2 = arith.constant 0 : index
    %1 = vector.load %arg3[%c0_1, %c0_2] : memref<16x1xf32, #tpu.memory_space<vmem>>, vector<16x1xf32>
    %c0_3 = arith.constant 0 : index
    %c0_4 = arith.constant 0 : index
    %c0_5 = arith.constant 0 : index
    %2 = vector.load %arg1[%c0_3, %c0_4, %c0_5] : memref<2x36x196xf32, #tpu.memory_space<vmem>>, vector<1x36x196xf32>
    %3 = vector.shape_cast %2 : vector<1x36x196xf32> to vector<36x196xf32>
    %cst = arith.constant dense<0.000000e+00> : vector<16x196xf32>
    %4 = tpu.matmul %0, %3, %cst {dimension_numbers = #tpu.dot_dimension_numbers<[1], [0], [0], [1], [0, 0, 1, 1], [], []>} : vector<16x36xf32>, vector<36x196xf32>, vector<16x196xf32> -> vector<16x196xf32>
    %5 = vector.broadcast %1 : vector<16x1xf32> to vector<16x196xf32>
    %6 = arith.addf %4, %5 : vector<16x196xf32>
    %cst_6 = arith.constant 0.000000e+00 : f32
    %7 = vector.broadcast %cst_6 : f32 to vector<16x196xf32>
    %8 = arith.maximumf %6, %7 : vector<16x196xf32>
    %c0_7 = arith.constant 0 : index
    %c0_8 = arith.constant 0 : index
    %c0_9 = arith.constant 0 : index
    %9 = vector.load %arg4[%c0_7, %c0_8, %c0_9] : memref<2x16x196xf32, #tpu.memory_space<vmem>>, vector<1x16x196xf32>
    %10 = vector.shape_cast %9 : vector<1x16x196xf32> to vector<16x196xf32>
    %11 = vector.shape_cast %8 : vector<16x196xf32> to vector<1x16x196xf32>
    tpu.vector_store %arg4[%c0_7, %c0_8, %c0_9], %11 {strides = array<i32>} : memref<2x16x196xf32, #tpu.memory_space<vmem>>, vector<1x16x196xf32>,
    %c1 = arith.constant 1 : index
    %c0_10 = arith.constant 0 : index
    %c0_11 = arith.constant 0 : index
    %12 = vector.load %arg1[%c1, %c0_10, %c0_11] : memref<2x36x196xf32, #tpu.memory_space<vmem>>, vector<1x36x196xf32>
    %13 = vector.shape_cast %12 : vector<1x36x196xf32> to vector<36x196xf32>
    %cst_12 = arith.constant dense<0.000000e+00> : vector<16x196xf32>
    %14 = tpu.matmul %0, %13, %cst_12 {dimension_numbers = #tpu.dot_dimension_numbers<[1], [0], [0], [1], [0, 0, 1, 1], [], []>} : vector<16x36xf32>, vector<36x196xf32>, vector<16x196xf32> -> vector<16x196xf32>
    %15 = vector.broadcast %1 : vector<16x1xf32> to vector<16x196xf32>
    %16 = arith.addf %14, %15 : vector<16x196xf32>
    %cst_13 = arith.constant 0.000000e+00 : f32
    %17 = vector.broadcast %cst_13 : f32 to vector<16x196xf32>
    %18 = arith.maximumf %16, %17 : vector<16x196xf32>
    %c1_14 = arith.constant 1 : index
    %c0_15 = arith.constant 0 : index
    %c0_16 = arith.constant 0 : index
    %19 = vector.load %arg4[%c1_14, %c0_15, %c0_16] : memref<2x16x196xf32, #tpu.memory_space<vmem>>, vector<1x16x196xf32>
    %20 = vector.shape_cast %19 : vector<1x16x196xf32> to vector<16x196xf32>
    %21 = vector.shape_cast %18 : vector<16x196xf32> to vector<1x16x196xf32>
    tpu.vector_store %arg4[%c1_14, %c0_15, %c0_16], %21 {strides = array<i32>} : memref<2x16x196xf32, #tpu.memory_space<vmem>>, vector<1x16x196xf32>,
    return
  }
  func.func @transform_0(%arg0: i32) -> (i32, i32, i32) {
    %c0_i32 = arith.constant 0 : i32
    %c0_i32_0 = arith.constant 0 : i32
    %c0_i32_1 = arith.constant 0 : i32
    %c0_i32_2 = arith.constant 0 : i32
    return %c0_i32, %c0_i32_0, %c0_i32_1 : i32, i32, i32
  }
  func.func @transform_1(%arg0: i32) -> (i32, i32) {
    %c0_i32 = arith.constant 0 : i32
    %c0_i32_0 = arith.constant 0 : i32
    %c0_i32_1 = arith.constant 0 : i32
    return %c0_i32, %c0_i32_0 : i32, i32
  }
  func.func @transform_2(%arg0: i32) -> (i32, i32) {
    %c0_i32 = arith.constant 0 : i32
    %c0_i32_0 = arith.constant 0 : i32
    %c0_i32_1 = arith.constant 0 : i32
    return %c0_i32, %c0_i32_0 : i32, i32
  }
  func.func @transform_3(%arg0: i32) -> (i32, i32, i32) {
    %c0_i32 = arith.constant 0 : i32
    %c0_i32_0 = arith.constant 0 : i32
    %c0_i32_1 = arith.constant 0 : i32
    %c0_i32_2 = arith.constant 0 : i32
    return %c0_i32, %c0_i32_0, %c0_i32_1 : i32, i32, i32
  }
}

</mosaic_0001>

<llo_original>
// kernel: tpu_custom_call.1
$region0: #{tpu_custom_call.1}
  #allocation0 [shape = 'u32[]', space=smem, size = 0x4, offset = 0x4, fixed_abs, tag = 'smem constant byte address 0x4 - core index']
  #allocation1 [shape = 'u32[144,128]{1,0:T(1,128)}', space=vmem, size = 0x12000, scoped, tag = 'internal scratch']
  %s0 = inlined_call_operand.vmem [shape: f32[2,36,196], index: 0, kind: input, shape index: {}]
  %s1 = inlined_call_operand.vmem [shape: f32[16,36], index: 1, kind: input, shape index: {}]
  %s2 = inlined_call_operand.vmem [shape: f32[16,1], index: 2, kind: input, shape index: {}]
  %s3 = inlined_call_operand.hbm [shape: f32[2,16,196], index: 3, kind: output, shape index: {}]
  %s4 = sld [smem:[#allocation0]]
  $region22: #{tpu_custom_call.1} parent=0
    _
  %s6 = ssub.s32 1, %s4
  %s7 = scalar_select 0, %s6, %s4
  $region1: #{tpu_custom_call.1} parent=0
    #allocation2 [shape = 'u8[32768]{0}', space=vmem, size = 0x8000, scoped, tag = 'output window, operand 0, single buffered']
    #allocation3 [shape = 's32[1]{0}', space=sflag, size = 0x4, scoped, tag = 'scoped memory for tpu_custom_call.1']
    %8 = vsyncpa [#allocation3], 0
    // Predicated region
    $region2: #{tpu_custom_call.1} parent=1 // pred_check
      _
    $region3: #{tpu_custom_call.1} parent=1 // pred_check_branch
      %10 = sbr.rel (0) target = $region5
    $region4: #{tpu_custom_call.1} parent=1 // pred_region
      _
    $region5: #{tpu_custom_call.1} parent=1 // pred_fallthru
      _
    // Predicated region
    $region6: #{tpu_custom_call.1} parent=1 // pred_check
      _
    $region7: #{tpu_custom_call.1} parent=1 // pred_check_branch
      %12 = sbr.rel (0) target = $region9
    $region8: #{tpu_custom_call.1} parent=1 // pred_region
      _
    $region9: #{tpu_custom_call.1} parent=1 // pred_fallthru
      _
    // Predicated region
    $region10: #{tpu_custom_call.1} parent=1 // pred_check
      _
    $region11: #{tpu_custom_call.1} parent=1 // pred_check_branch
      %14 = sbr.rel (0) target = $region13
    $region12: #{tpu_custom_call.1} parent=1 // pred_region
      _
    $region13: #{tpu_custom_call.1} parent=1 // pred_fallthru
      _
    %v15 = vld [vmem:[%s1] sm:$0xff]
    %v16 = vld [vmem:[%s1 + $0x8] sm:$0xff]
    %v17 = vld [vmem:[%s2] sm:$0xff]
    %v18 = vld [vmem:[%s2 + $0x8] sm:$0xff]
    %v19 = vld [vmem:[%s0] sm:$0xff]
    %v20 = vld [vmem:[%s0 + $0x8] sm:$0xff]
    %v21 = vld [vmem:[%s0 + $0x10] sm:$0xff]
    %v22 = vld [vmem:[%s0 + $0x18] sm:$0xff]
    %v23 = vld [vmem:[%s0 + $0x20] sm:$0xff]
    %v24 = vld [vmem:[%s0 + $0x28] sm:$0xff]
    %v25 = vld [vmem:[%s0 + $0x30] sm:$0xff]
    %v26 = vld [vmem:[%s0 + $0x38] sm:$0xff]
    %v27 = vld [vmem:[%s0 + $0x40] sm:$0xf]
    %v28 = vld [vmem:[%s0 + $0x48] sm:$0xf]
    %30 = vset.pattern.permute.xlu0 0
    %31 = vperm.xlu0 %30, %v17
    %v32 = vpop.permute.xlu0 %31
    %35 = vset.pattern.permute.xlu0 0
    %36 = vperm.xlu0 %35, %v18
    %v37 = vpop.permute.xlu0 %36
    %vm39 = vcmask 293888
    %v41 = vsel %vm39, %v15, 0
    %v44 = vsel %vm39, %v16, 0
    %vm46 = vcmask 1043456
    %v48 = vsel %vm46, %v27, 0
    %v51 = vsel %vm46, %v28, 0
    %53 = vmatprep.subr.mxu0 0.0
    %54 = vmatpush1.msra.mxu0 0.0
    %55 = vmatprep.subr.mxu0 0.0
    %56 = vmatpush1.msra.mxu0 0.0
    %57 = vmatprep.subr.mxu0 0.0
    %58 = vmatpush1.msra.mxu0 0.0
    %59 = vmatprep.subr.mxu0 0.0
    %60 = vmatpush1.msra.mxu0 0.0
    %61 = vmatprep.subr.mxu0 0.0
    %62 = vmatpush1.msra.mxu0 0.0
    %63 = vmatprep.subr.mxu0 0.0
    %64 = vmatpush1.msra.mxu0 0.0
    %65 = vmatprep.subr.mxu0 0.0
    %66 = vmatpush1.msra.mxu0 0.0
    %67 = vmatprep.subr.mxu0 0.0
    %68 = vmatpush1.msra.mxu0 0.0
    %69 = vmatprep.subr.mxu0 0.0
    %70 = vmatpush1.msra.mxu0 0.0
    %71 = vmatprep.subr.mxu0 0.0
    %72 = vmatpush1.msra.mxu0 0.0
    %73 = vmatprep.subr.mxu0 0.0
    %74 = vmatpush1.msra.mxu0 0.0
    %75 = vmatprep.subr.mxu0 %v51
    %76 = vmatpush1.msra.mxu0 %v48
    %77 = vmatprep.subr.mxu0 %v26
    %78 = vmatpush1.msra.mxu0 %v25
    %79 = vmatprep.subr.mxu0 %v24
    %80 = vmatpush1.msra.mxu0 %v23
    %81 = vmatprep.subr.mxu0 %v22
    %82 = vmatpush1.msra.mxu0 %v21
    %83 = vmatprep.subr.mxu0 %v20
    %84 = vmatpush1.msra.mxu0 %v19
    %85 = vmatprep.subr.mxu0 0.0
    %86 = vmatpush2.msra.mxu0 0.0
    %87 = vmatprep.subr.mxu0 0.0
    %88 = vmatpush2.msra.mxu0 0.0
    %89 = vmatprep.subr.mxu0 0.0
    %90 = vmatpush2.msra.mxu0 0.0
    %91 = vmatprep.subr.mxu0 0.0
    %92 = vmatpush2.msra.mxu0 0.0
    %93 = vmatprep.subr.mxu0 0.0
    %94 = vmatpush2.msra.mxu0 0.0
    %95 = vmatprep.subr.mxu0 0.0
    %96 = vmatpush2.msra.mxu0 0.0
    %97 = vmatprep.subr.mxu0 0.0
    %98 = vmatpush2.msra.mxu0 0.0
    %99 = vmatprep.subr.mxu0 0.0
    %100 = vmatpush2.msra.mxu0 0.0
    %101 = vmatprep.subr.mxu0 0.0
    %102 = vmatpush2.msra.mxu0 0.0
    %103 = vmatprep.subr.mxu0 0.0
    %104 = vmatpush2.msra.mxu0 0.0
    %105 = vmatprep.subr.mxu0 0.0
    %106 = vmatpush2.msra.mxu0 0.0
    %107 = vmatprep.subr.mxu0 0.0
    %108 = vmatpush2.msra.mxu0 0.0
    %109 = vmatprep.subr.mxu0 0.0
    %110 = vmatpush2.msra.mxu0 0.0
    %111 = vmatprep.subr.mxu0 0.0
    %112 = vmatpush2.msra.mxu0 0.0
    %113 = vmatprep.subr.mxu0 0.0
    %114 = vmatpush2.msra.mxu0 0.0
    %115 = vmatprep.subr.mxu0 0.0
    %116 = vmatpush2.msra.mxu0 0.0
    %117 = vmatprep.mubr.f32.mxu0 0.0
    %118 = vmatmul.mubr.f32.gmra.mxu0 %v41
    %v119 = vpop.f32.mrf.mxu0
    %v120 = vadd.f32 %v32, %v119
    %v121 = vpop.f32.mrf.mxu0
    %v122 = vadd.f32 %v32, %v121
    %123 = vmatprep.mubr.f32.mxu0 0.0
    %124 = vmatmul.mubr.f32.gmra.mxu0 %v44
    %v125 = vpop.f32.mrf.mxu0
    %v126 = vadd.f32 %v37, %v125
    %v127 = vpop.f32.mrf.mxu0
    %v128 = vadd.f32 %v37, %v127
    %129 = vdwg.mxu0
    %v130 = vmax.f32 %v120, 0.0
    %v131 = vmax.f32 %v122, 0.0
    %v132 = vmax.f32 %v126, 0.0
    %v133 = vmax.f32 %v128, 0.0
    %134 = vst [vmem:[#allocation2] sm:$0xff] %v130
    %vm135 = vcmask 556032
    %136 = vst.msk [vmem:[#allocation2 + $0x8] sm:$0xff] %vm135, %v131
    %137 = vst [vmem:[#allocation2 + $0x10] sm:$0xff] %v132
    %138 = vst.msk [vmem:[#allocation2 + $0x18] sm:$0xff] %vm135, %v133
    %s139 = scalar_lea.vmem %s0, 80
    %v140 = vld [vmem:[%s139] sm:$0xff]
    %v141 = vld [vmem:[%s139 + $0x8] sm:$0xff]
    %v142 = vld [vmem:[%s139 + $0x10] sm:$0xff]
    %v143 = vld [vmem:[%s139 + $0x18] sm:$0xff]
    %v144 = vld [vmem:[%s139 + $0x20] sm:$0xff]
    %v145 = vld [vmem:[%s139 + $0x28] sm:$0xff]
    %v146 = vld [vmem:[%s139 + $0x30] sm:$0xff]
    %v147 = vld [vmem:[%s139 + $0x38] sm:$0xff]
    %v148 = vld [vmem:[%s139 + $0x40] sm:$0xf]
    %v149 = vld [vmem:[%s139 + $0x48] sm:$0xf]
    %v151 = vsel %vm46, %v148, 0
    %v154 = vsel %vm46, %v149, 0
    %156 = vmatprep.subr.mxu0 0.0
    %157 = vmatpush1.msra.mxu0 0.0
    %158 = vmatprep.subr.mxu0 0.0
    %159 = vmatpush1.msra.mxu0 0.0
    %160 = vmatprep.subr.mxu0 0.0
    %161 = vmatpush1.msra.mxu0 0.0
    %162 = vmatprep.subr.mxu0 0.0
    %163 = vmatpush1.msra.mxu0 0.0
    %164 = vmatprep.subr.mxu0 0.0
    %165 = vmatpush1.msra.mxu0 0.0
    %166 = vmatprep.subr.mxu0 0.0
    %167 = vmatpush1.msra.mxu0 0.0
    %168 = vmatprep.subr.mxu0 0.0
    %169 = vmatpush1.msra.mxu0 0.0
    %170 = vmatprep.subr.mxu0 0.0
    %171 = vmatpush1.msra.mxu0 0.0
    %172 = vmatprep.subr.mxu0 0.0
    %173 = vmatpush1.msra.mxu0 0.0
    %174 = vmatprep.subr.mxu0 0.0
    %175 = vmatpush1.msra.mxu0 0.0
    %176 = vmatprep.subr.mxu0 0.0
    %177 = vmatpush1.msra.mxu0 0.0
    %178 = vmatprep.subr.mxu0 %v154
    %179 = vmatpush1.msra.mxu0 %v151
    %180 = vmatprep.subr.mxu0 %v147
    %181 = vmatpush1.msra.mxu0 %v146
    %182 = vmatprep.subr.mxu0 %v145
    %183 = vmatpush1.msra.mxu0 %v144
    %184 = vmatprep.subr.mxu0 %v143
    %185 = vmatpush1.msra.mxu0 %v142
    %186 = vmatprep.subr.mxu0 %v141
    %187 = vmatpush1.msra.mxu0 %v140
    %188 = vmatprep.subr.mxu0 0.0
    %189 = vmatpush2.msra.mxu0 0.0
    %190 = vmatprep.subr.mxu0 0.0
    %191 = vmatpush2.msra.mxu0 0.0
    %192 = vmatprep.subr.mxu0 0.0
    %193 = vmatpush2.msra.mxu0 0.0
    %194 = vmatprep.subr.mxu0 0.0
    %195 = vmatpush2.msra.mxu0 0.0
    %196 = vmatprep.subr.mxu0 0.0
    %197 = vmatpush2.msra.mxu0 0.0
    %198 = vmatprep.subr.mxu0 0.0
    %199 = vmatpush2.msra.mxu0 0.0
    %200 = vmatprep.subr.mxu0 0.0
    %201 = vmatpush2.msra.mxu0 0.0
    %202 = vmatprep.subr.mxu0 0.0
    %203 = vmatpush2.msra.mxu0 0.0
    %204 = vmatprep.subr.mxu0 0.0
    %205 = vmatpush2.msra.mxu0 0.0
    %206 = vmatprep.subr.mxu0 0.0
    %207 = vmatpush2.msra.mxu0 0.0
    %208 = vmatprep.subr.mxu0 0.0
    %209 = vmatpush2.msra.mxu0 0.0
    %210 = vmatprep.subr.mxu0 0.0
    %211 = vmatpush2.msra.mxu0 0.0
    %212 = vmatprep.subr.mxu0 0.0
    %213 = vmatpush2.msra.mxu0 0.0
    %214 = vmatprep.subr.mxu0 0.0
    %215 = vmatpush2.msra.mxu0 0.0
    %216 = vmatprep.subr.mxu0 0.0
    %217 = vmatpush2.msra.mxu0 0.0
    %218 = vmatprep.subr.mxu0 0.0
    %219 = vmatpush2.msra.mxu0 0.0
    %220 = vmatprep.mubr.f32.mxu0 0.0
    %221 = vmatmul.mubr.f32.gmra.mxu0 %v41
    %v222 = vpop.f32.mrf.mxu0
    %v223 = vadd.f32 %v32, %v222
    %v224 = vpop.f32.mrf.mxu0
    %v225 = vadd.f32 %v32, %v224
    %226 = vmatprep.mubr.f32.mxu0 0.0
    %227 = vmatmul.mubr.f32.gmra.mxu0 %v44
    %v228 = vpop.f32.mrf.mxu0
    %v229 = vadd.f32 %v37, %v228
    %v230 = vpop.f32.mrf.mxu0
    %v231 = vadd.f32 %v37, %v230
    %232 = vdwg.mxu0
    %v233 = vmax.f32 %v223, 0.0
    %v234 = vmax.f32 %v225, 0.0
    %v235 = vmax.f32 %v229, 0.0
    %v236 = vmax.f32 %v231, 0.0
    %s237 = scalar_lea.vmem [#allocation2], 32
    %238 = vst [vmem:[%s237] sm:$0xff] %v233
    %239 = vst.msk [vmem:[%s237 + $0x8] sm:$0xff] %vm135, %v234
    %240 = vst [vmem:[%s237 + $0x10] sm:$0xff] %v235
    %241 = vst.msk [vmem:[%s237 + $0x18] sm:$0xff] %vm135, %v236
    // Predicated region
    $region14: #{tpu_custom_call.1} parent=1 // pred_check
      _
    $region15: #{tpu_custom_call.1} parent=1 // pred_check_branch
      %243 = sbr.rel (0) target = $region17
    $region16: #{tpu_custom_call.1} parent=1 // pred_region
      %s245 = ssub.s32 1024, 1024
      %246 = vsyncadd [#allocation3], %s245
      %s247 = sshll.u32 [#allocation2], 4
      %s248 = int_to_ptr.vmem [resolvable:$true] %s247
      %253 = dma.vmem_to_hbm [thread:$0]  %s248, 1024, %s3, [#allocation3], 256, 256, 16
    $region17: #{tpu_custom_call.1} parent=1 // pred_fallthru
      _
    // Predicated region
    $region18: #{tpu_custom_call.1} parent=1 // pred_check
      _
    $region19: #{tpu_custom_call.1} parent=1 // pred_check_branch
      %255 = sbr.rel (0) target = $region21
    $region20: #{tpu_custom_call.1} parent=1 // pred_region
      %256 = dma.done [#allocation3], 1024
    $region21: #{tpu_custom_call.1} parent=1 // pred_fallthru
      _
    %257 = vsyncpa [#allocation3], 1

</llo_original>
